<compile_context>
chip_gen: v6e
topology: v6e:2x2x1
jax: 0.10.0
libtpu: 0.0.40
codegen_flags: <defaults>
</compile_context>

<pallas_src>
import functools

import jax
import jax.numpy as jnp
from jax.experimental import pallas as pl
from jax.experimental.pallas import tpu as pltpu

LANE = 128


def _round_up(x, m):
    return ((x + m - 1) // m) * m


def policy_kernel(x_ref, w1_ref, b1_ref, w2_ref, b2_ref, w3_ref, b3_ref, out_ref):
    x = x_ref[...]  # bf16 (TB, state_dim)

    # fc1 + ReLU  (bf16 matmul, f32 accumulate; elementwise stays f32)
    h1 = jnp.dot(x, w1_ref[...], preferred_element_type=jnp.float32) + b1_ref[...]
    h1 = jnp.maximum(h1, 0.0)

    # fc2 + ReLU
    h2 = jnp.dot(h1.astype(jnp.bfloat16), w2_ref[...],
                 preferred_element_type=jnp.float32) + b2_ref[...]
    h2 = jnp.maximum(h2, 0.0)

    # action_head (padded to 128 lanes; padded lanes carry a -1e30 bias) + softmax
    logits = jnp.dot(h2.astype(jnp.bfloat16), w3_ref[...],
                     preferred_element_type=jnp.float32) + b3_ref[...]
    m = jnp.max(logits, axis=-1, keepdims=True)
    e = jnp.exp(logits - m)
    probs = e * pl.reciprocal(jnp.sum(e, axis=-1, keepdims=True), approx=True)

    out_ref[...] = probs.astype(out_ref.dtype)  # lane-dense (TB, 128) store


@functools.partial(jax.jit, static_argnames=("batch_tile",))
def policy_network_forward(state, params, *, batch_tile=256):
    """Fused forward pass. state: (B, state_dim) f32 -> (B, n_actions) f32."""
    w1, b1, w2, b2, w3, b3 = params
    B, _ = state.shape
    hidden_dim = w1.shape[1]
    n_actions = w3.shape[1]

    # --- pad action head to a lane-dense 128-wide output ---------------------
    n_pad = _round_up(max(n_actions, LANE), LANE)
    w3p = jnp.zeros((hidden_dim, n_pad), jnp.float32).at[:, :n_actions].set(w3)
    b3p = jnp.full((1, n_pad), -1e30, jnp.float32).at[:, :n_actions].set(b3)

    # --- batch tiling (TB multiple of 8; pad batch to a multiple of TB) ------
    TB = min(batch_tile, _round_up(B, 8))
    B_pad = _round_up(B, TB)
    if B_pad != B:
        state = jnp.pad(state, ((0, B_pad - B), (0, 0)))

    # --- bf16 feeds for the MXU (f32 accumulation inside the kernel) ---------
    x_bf = state.astype(jnp.bfloat16)
    w1_bf = w1.astype(jnp.bfloat16)
    w2_bf = w2.astype(jnp.bfloat16)
    w3_bf = w3p.astype(jnp.bfloat16)

    grid = (B_pad // TB,)

    def row_spec(shape):  # batch-tiled operands (state / output)
        return pl.BlockSpec((TB,) + shape[1:], lambda i: (i,) + (0,) * (len(shape) - 1))

    def const_spec(shape):  # weights / biases: VMEM-resident across grid steps
        return pl.BlockSpec(shape, lambda i: (0,) * len(shape))

    out = pl.pallas_call(
        policy_kernel,
        out_shape=jax.ShapeDtypeStruct((B_pad, n_pad), jnp.float32),
        grid=grid,
        in_specs=[
            row_spec(x_bf.shape),
            const_spec(w1_bf.shape), const_spec(b1.shape),
            const_spec(w2_bf.shape), const_spec(b2.shape),
            const_spec(w3_bf.shape), const_spec(b3p.shape),
        ],
        out_specs=pl.BlockSpec((TB, n_pad), lambda i: (i, 0)),
        compiler_params=pltpu.CompilerParams(
            dimension_semantics=("parallel",),   # v7x: shard batch tiles over 2 TCs
            vmem_limit_bytes=48 << 20,           # within v7x's 64 MiB physical VMEM
        ),
    )(x_bf, w1_bf, b1, w2_bf, b2, w3_bf, b3p)

    return out[:B, :n_actions]


def init_params(key, state_dim, hidden_dim, n_actions):
    """Deterministic init matching nn.Linear shapes (stored transposed: (in, out))."""
    ks = jax.random.split(key, 6)

    def linear(kw, kb, fan_in, fan_out):
        bound = 1.0 / jnp.sqrt(fan_in)
        w = jax.random.uniform(kw, (fan_in, fan_out), jnp.float32, -bound, bound)
        b = jax.random.uniform(kb, (1, fan_out), jnp.float32, -bound, bound)
        return w, b

    w1, b1 = linear(ks[0], ks[1], state_dim, hidden_dim)
    w2, b2 = linear(ks[2], ks[3], hidden_dim, hidden_dim)
    w3, b3 = linear(ks[4], ks[5], hidden_dim, n_actions)
    return (w1, b1, w2, b2, w3, b3)


def reference_forward_f32(state, params):
    w1, b1, w2, b2, w3, b3 = params
    h1 = jnp.maximum(state @ w1 + b1, 0.0)
    h2 = jnp.maximum(h1 @ w2 + b2, 0.0)
    logits = h2 @ w3 + b3
    return jax.nn.softmax(logits, axis=-1)


def reference_forward_bf16(state, params):
    """Matches the kernel's precision choices (bf16 matmul inputs, f32 accum)."""
    w1, b1, w2, b2, w3, b3 = params
    bf = jnp.bfloat16
    dot = lambda a, b: jnp.dot(a.astype(bf), b.astype(bf),
                               preferred_element_type=jnp.float32)
    h1 = jnp.maximum(dot(state, w1) + b1, 0.0)
    h2 = jnp.maximum(dot(h1, w2) + b2, 0.0)
    logits = dot(h2, w3) + b3
    return jax.nn.softmax(logits, axis=-1)


if __name__ == "__main__":
    state_dim, hidden_dim, n_actions = 16, 32, 8
    batch = 2

    key = jax.random.PRNGKey(0)
    k_params, k_state = jax.random.split(key)

    params = init_params(k_params, state_dim, hidden_dim, n_actions)
    state = jax.random.normal(k_state, (batch, state_dim), jnp.float32)

    probs = policy_network_forward(state, params)
    probs = jax.block_until_ready(probs)

    assert probs.shape == (batch, n_actions)

    # precision-matched reference (bf16 matmul feeds, f32 accumulation)
    ref_bf16 = reference_forward_bf16(state, params)
    assert jnp.allclose(probs, ref_bf16, atol=1e-2, rtol=1e-2)

    # full-f32 reference (looser: bf16 weights + approx reciprocal)
    ref_f32 = reference_forward_f32(state, params)
    assert jnp.allclose(probs, ref_f32, atol=5e-2, rtol=5e-2)

    # probability rows must still sum to ~1 (approx reciprocal tolerance)
    assert jnp.allclose(jnp.sum(probs, axis=-1), 1.0, atol=5e-3)

    print("KERNEL_OK")
</pallas_src>

<mosaic_0001>
module attributes {stable_mosaic.version = 11 : i64} {
  func.func @policy_kernel(%arg0: i32, %arg1: memref<8x16xbf16, #tpu.memory_space<vmem>>, %arg2: memref<16x32xbf16, #tpu.memory_space<vmem>>, %arg3: memref<1x32xf32, #tpu.memory_space<vmem>>, %arg4: memref<32x32xbf16, #tpu.memory_space<vmem>>, %arg5: memref<1x32xf32, #tpu.memory_space<vmem>>, %arg6: memref<32x128xbf16, #tpu.memory_space<vmem>>, %arg7: memref<1x128xf32, #tpu.memory_space<vmem>>, %arg8: memref<8x128xf32, #tpu.memory_space<vmem>>) attributes {dimension_semantics = [#tpu.dimension_semantics<parallel>], iteration_bounds = array<i64: 1>, scalar_prefetch = 0 : i64, scratch_operands = 0 : i64, tpu.core_type = #tpu.core_type<tc>, window_params = [{transform_indices = @transform_0, window_bounds = array<i64: 8, 16>}, {pipeline_mode = #tpu.pipeline_mode<synchronous>, transform_indices = @transform_1, window_bounds = array<i64: 16, 32>}, {pipeline_mode = #tpu.pipeline_mode<synchronous>, transform_indices = @transform_2, window_bounds = array<i64: 1, 32>}, {pipeline_mode = #tpu.pipeline_mode<synchronous>, transform_indices = @transform_3, window_bounds = array<i64: 32, 32>}, {pipeline_mode = #tpu.pipeline_mode<synchronous>, transform_indices = @transform_4, window_bounds = array<i64: 1, 32>}, {pipeline_mode = #tpu.pipeline_mode<synchronous>, transform_indices = @transform_5, window_bounds = array<i64: 32, 128>}, {pipeline_mode = #tpu.pipeline_mode<synchronous>, transform_indices = @transform_6, window_bounds = array<i64: 1, 128>}, {transform_indices = @transform_7, window_bounds = array<i64: 8, 128>}]} {
    %c0 = arith.constant 0 : index
    %c0_0 = arith.constant 0 : index
    %0 = vector.load %arg1[%c0, %c0_0] : memref<8x16xbf16, #tpu.memory_space<vmem>>, vector<8x16xbf16>
    %c0_1 = arith.constant 0 : index
    %c0_2 = arith.constant 0 : index
    %1 = vector.load %arg2[%c0_1, %c0_2] : memref<16x32xbf16, #tpu.memory_space<vmem>>, vector<16x32xbf16>
    %cst = arith.constant dense<0.000000e+00> : vector<8x32xf32>
    %2 = tpu.matmul %0, %1, %cst {dimension_numbers = #tpu.dot_dimension_numbers<[1], [0], [0], [1], [0, 0, 1, 1], [], []>} : vector<8x16xbf16>, vector<16x32xbf16>, vector<8x32xf32> -> vector<8x32xf32>
    %c0_3 = arith.constant 0 : index
    %c0_4 = arith.constant 0 : index
    %3 = vector.load %arg3[%c0_3, %c0_4] : memref<1x32xf32, #tpu.memory_space<vmem>>, vector<1x32xf32>
    %4 = vector.broadcast %3 : vector<1x32xf32> to vector<8x32xf32>
    %5 = arith.addf %2, %4 : vector<8x32xf32>
    %cst_5 = arith.constant 0.000000e+00 : f32
    %6 = vector.broadcast %cst_5 : f32 to vector<8x32xf32>
    %7 = arith.maximumf %5, %6 : vector<8x32xf32>
    %8 = arith.truncf %7 : vector<8x32xf32> to vector<8x32xbf16>
    %c0_6 = arith.constant 0 : index
    %c0_7 = arith.constant 0 : index
    %9 = vector.load %arg4[%c0_6, %c0_7] : memref<32x32xbf16, #tpu.memory_space<vmem>>, vector<32x32xbf16>
    %cst_8 = arith.constant dense<0.000000e+00> : vector<8x32xf32>
    %10 = tpu.matmul %8, %9, %cst_8 {dimension_numbers = #tpu.dot_dimension_numbers<[1], [0], [0], [1], [0, 0, 1, 1], [], []>} : vector<8x32xbf16>, vector<32x32xbf16>, vector<8x32xf32> -> vector<8x32xf32>
    %c0_9 = arith.constant 0 : index
    %c0_10 = arith.constant 0 : index
    %11 = vector.load %arg5[%c0_9, %c0_10] : memref<1x32xf32, #tpu.memory_space<vmem>>, vector<1x32xf32>
    %12 = vector.broadcast %11 : vector<1x32xf32> to vector<8x32xf32>
    %13 = arith.addf %10, %12 : vector<8x32xf32>
    %cst_11 = arith.constant 0.000000e+00 : f32
    %14 = vector.broadcast %cst_11 : f32 to vector<8x32xf32>
    %15 = arith.maximumf %13, %14 : vector<8x32xf32>
    %16 = arith.truncf %15 : vector<8x32xf32> to vector<8x32xbf16>
    %c0_12 = arith.constant 0 : index
    %c0_13 = arith.constant 0 : index
    %17 = vector.load %arg6[%c0_12, %c0_13] : memref<32x128xbf16, #tpu.memory_space<vmem>>, vector<32x128xbf16>
    %cst_14 = arith.constant dense<0.000000e+00> : vector<8x128xf32>
    %18 = tpu.matmul %16, %17, %cst_14 {dimension_numbers = #tpu.dot_dimension_numbers<[1], [0], [0], [1], [0, 0, 1, 1], [], []>} : vector<8x32xbf16>, vector<32x128xbf16>, vector<8x128xf32> -> vector<8x128xf32>
    %c0_15 = arith.constant 0 : index
    %c0_16 = arith.constant 0 : index
    %19 = vector.load %arg7[%c0_15, %c0_16] : memref<1x128xf32, #tpu.memory_space<vmem>>, vector<1x128xf32>
    %20 = vector.broadcast %19 : vector<1x128xf32> to vector<8x128xf32>
    %21 = arith.addf %18, %20 : vector<8x128xf32>
    %cst_17 = arith.constant dense<0xFF800000> : vector<8xf32>
    %22 = vector.multi_reduction <maximumf>, %21, %cst_17 [1] : vector<8x128xf32> to vector<8xf32>
    %23 = vector.shape_cast %22 : vector<8xf32> to vector<8x1xf32>
    %24 = vector.broadcast %23 : vector<8x1xf32> to vector<8x128xf32>
    %25 = arith.subf %21, %24 : vector<8x128xf32>
    %26 = math.exp %25 : vector<8x128xf32>
    %cst_18 = arith.constant dense<0.000000e+00> : vector<8xf32>
    %27 = vector.multi_reduction <add>, %26, %cst_18 [1] : vector<8x128xf32> to vector<8xf32>
    %28 = vector.shape_cast %27 : vector<8xf32> to vector<8x1xf32>
    %29 = tpu.reciprocal %28 {approx = true} : vector<8x1xf32> -> vector<8x1xf32>
    %30 = vector.broadcast %29 : vector<8x1xf32> to vector<8x128xf32>
    %31 = arith.mulf %26, %30 : vector<8x128xf32>
    %c0_19 = arith.constant 0 : index
    %c0_20 = arith.constant 0 : index
    %32 = vector.load %arg8[%c0_19, %c0_20] : memref<8x128xf32, #tpu.memory_space<vmem>>, vector<8x128xf32>
    tpu.vector_store %arg8[%c0_19, %c0_20], %31 {strides = array<i32>} : memref<8x128xf32, #tpu.memory_space<vmem>>, vector<8x128xf32>,
    return
  }
  func.func @transform_0(%arg0: i32) -> (i32, i32) {
    %c0_i32 = arith.constant 0 : i32
    %c0_i32_0 = arith.constant 0 : i32
    return %arg0, %c0_i32 : i32, i32
  }
  func.func @transform_1(%arg0: i32) -> (i32, i32) {
    %c0_i32 = arith.constant 0 : i32
    %c0_i32_0 = arith.constant 0 : i32
    %c0_i32_1 = arith.constant 0 : i32
    return %c0_i32, %c0_i32_0 : i32, i32
  }
  func.func @transform_2(%arg0: i32) -> (i32, i32) {
    %c0_i32 = arith.constant 0 : i32
    %c0_i32_0 = arith.constant 0 : i32
    %c0_i32_1 = arith.constant 0 : i32
    return %c0_i32, %c0_i32_0 : i32, i32
  }
  func.func @transform_3(%arg0: i32) -> (i32, i32) {
    %c0_i32 = arith.constant 0 : i32
    %c0_i32_0 = arith.constant 0 : i32
    %c0_i32_1 = arith.constant 0 : i32
    return %c0_i32, %c0_i32_0 : i32, i32
  }
  func.func @transform_4(%arg0: i32) -> (i32, i32) {
    %c0_i32 = arith.constant 0 : i32
    %c0_i32_0 = arith.constant 0 : i32
    %c0_i32_1 = arith.constant 0 : i32
    return %c0_i32, %c0_i32_0 : i32, i32
  }
  func.func @transform_5(%arg0: i32) -> (i32, i32) {
    %c0_i32 = arith.constant 0 : i32
    %c0_i32_0 = arith.constant 0 : i32
    %c0_i32_1 = arith.constant 0 : i32
    return %c0_i32, %c0_i32_0 : i32, i32
  }
  func.func @transform_6(%arg0: i32) -> (i32, i32) {
    %c0_i32 = arith.constant 0 : i32
    %c0_i32_0 = arith.constant 0 : i32
    %c0_i32_1 = arith.constant 0 : i32
    return %c0_i32, %c0_i32_0 : i32, i32
  }
  func.func @transform_7(%arg0: i32) -> (i32, i32) {
    %c0_i32 = arith.constant 0 : i32
    %c0_i32_0 = arith.constant 0 : i32
    return %arg0, %c0_i32 : i32, i32
  }
}

</mosaic_0001>

<llo_original>
// kernel: policy_network_forward.1
$region0: #{policy_network_forward.1}
  #allocation0 [shape = 'u32[]', space=smem, size = 0x4, offset = 0x4, fixed_abs, tag = 'smem constant byte address 0x4 - core index']
  #allocation1 [shape = 'u32[144,128]{1,0:T(1,128)}', space=vmem, size = 0x12000, scoped, tag = 'internal scratch']
  %s0 = inlined_call_operand.vmem [shape: bf16[8,16], index: 0, kind: input, shape index: {}]
  %s1 = inlined_call_operand.vmem [shape: bf16[16,32], index: 1, kind: input, shape index: {}]
  %s2 = inlined_call_operand.vmem [shape: f32[1,32], index: 2, kind: input, shape index: {}]
  %s3 = inlined_call_operand.vmem [shape: bf16[32,32], index: 3, kind: input, shape index: {}]
  %s4 = inlined_call_operand.vmem [shape: f32[1,32], index: 4, kind: input, shape index: {}]
  %s5 = inlined_call_operand.vmem [shape: bf16[32,128], index: 5, kind: input, shape index: {}]
  %s6 = inlined_call_operand.vmem [shape: f32[1,128], index: 6, kind: input, shape index: {}]
  %s7 = inlined_call_operand.vmem [shape: f32[8,128], index: 7, kind: output, shape index: {}]
  %s8 = sld [smem:[#allocation0]]
  $region38: #{policy_network_forward.1} parent=0
    _
  %s10 = ssub.s32 1, %s8
  %s11 = scalar_select 0, %s10, %s8
  // Predicated region
  $region2: #{policy_network_forward.1} parent=0 // pred_check
    _
  $region3: #{policy_network_forward.1} parent=0 // pred_check_branch
    %13 = sbr.rel (0) target = $region5
  $region4: #{policy_network_forward.1} parent=0 // pred_region
    _
  $region5: #{policy_network_forward.1} parent=0 // pred_fallthru
    _
  // Predicated region
  $region6: #{policy_network_forward.1} parent=0 // pred_check
    _
  $region7: #{policy_network_forward.1} parent=0 // pred_check_branch
    %15 = sbr.rel (0) target = $region9
  $region8: #{policy_network_forward.1} parent=0 // pred_region
    _
  $region9: #{policy_network_forward.1} parent=0 // pred_fallthru
    _
  // Predicated region
  $region10: #{policy_network_forward.1} parent=0 // pred_check
    _
  $region11: #{policy_network_forward.1} parent=0 // pred_check_branch
    %17 = sbr.rel (0) target = $region13
  $region12: #{policy_network_forward.1} parent=0 // pred_region
    _
  $region13: #{policy_network_forward.1} parent=0 // pred_fallthru
    _
  // Predicated region
  $region14: #{policy_network_forward.1} parent=0 // pred_check
    _
  $region15: #{policy_network_forward.1} parent=0 // pred_check_branch
    %19 = sbr.rel (0) target = $region17
  $region16: #{policy_network_forward.1} parent=0 // pred_region
    _
  $region17: #{policy_network_forward.1} parent=0 // pred_fallthru
    _
  // Predicated region
  $region18: #{policy_network_forward.1} parent=0 // pred_check
    _
  $region19: #{policy_network_forward.1} parent=0 // pred_check_branch
    %21 = sbr.rel (0) target = $region21
  $region20: #{policy_network_forward.1} parent=0 // pred_region
    _
  $region21: #{policy_network_forward.1} parent=0 // pred_fallthru
    _
  // Predicated region
  $region22: #{policy_network_forward.1} parent=0 // pred_check
    _
  $region23: #{policy_network_forward.1} parent=0 // pred_check_branch
    %23 = sbr.rel (0) target = $region25
  $region24: #{policy_network_forward.1} parent=0 // pred_region
    _
  $region25: #{policy_network_forward.1} parent=0 // pred_fallthru
    _
  // Predicated region
  $region26: #{policy_network_forward.1} parent=0 // pred_check
    _
  $region27: #{policy_network_forward.1} parent=0 // pred_check_branch
    %25 = sbr.rel (0) target = $region29
  $region28: #{policy_network_forward.1} parent=0 // pred_region
    _
  $region29: #{policy_network_forward.1} parent=0 // pred_fallthru
    _
  %v27 = vld [vmem:[%s0] sm:$0xf]
  %v28 = vld [vmem:[%s1] sm:$0xf]
  %v29 = vld [vmem:[%s1 + $0x4] sm:$0xf]
  %v30 = vld [vmem:[%s2] sm:$0x1]
  %v32 = vlaneseq
  %v33 = vshrl.u32 %v32, 7
  %v34 = vsub.s32 0, %v33
  %v35 = vrot.slane %v30, %v34
  %v39 = vunpack.c.l.b16 %v28
  %v40 = vunpack.c.l.b16 %v29
  %v41 = vpack.c.b16 %v40, %v39
  %vm43 = vcmask 130048
  %v45 = vsel %vm43, %v27, 0
  %47 = vmatprep.subr.bf16.mxu0 0
  %48 = vmatpush1.bf16.msra.mxu0 0
  %49 = vmatprep.subr.bf16.mxu0 0
  %50 = vmatpush1.bf16.msra.mxu0 0
  %51 = vmatprep.subr.bf16.mxu0 0
  %52 = vmatpush1.bf16.msra.mxu0 0
  %53 = vmatprep.subr.bf16.mxu0 0
  %54 = vmatpush1.bf16.msra.mxu0 0
  %55 = vmatprep.subr.bf16.mxu0 0
  %56 = vmatpush1.bf16.msra.mxu0 0
  %57 = vmatprep.subr.bf16.mxu0 0
  %58 = vmatpush1.bf16.msra.mxu0 0
  %59 = vmatprep.subr.bf16.mxu0 0
  %60 = vmatpush1.bf16.msra.mxu0 0
  %61 = vmatprep.subr.bf16.mxu0 0
  %62 = vmatpush1.bf16.msra.mxu0 %v41
  %63 = vmatprep.subr.bf16.mxu0 0
  %64 = vmatpush2.bf16.msra.mxu0 0
  %65 = vmatprep.subr.bf16.mxu0 0
  %66 = vmatpush2.bf16.msra.mxu0 0
  %67 = vmatprep.subr.bf16.mxu0 0
  %68 = vmatpush2.bf16.msra.mxu0 0
  %69 = vmatprep.subr.bf16.mxu0 0
  %70 = vmatpush2.bf16.msra.mxu0 0
  %71 = vmatprep.subr.bf16.mxu0 0
  %72 = vmatpush2.bf16.msra.mxu0 0
  %73 = vmatprep.subr.bf16.mxu0 0
  %74 = vmatpush2.bf16.msra.mxu0 0
  %75 = vmatprep.subr.bf16.mxu0 0
  %76 = vmatpush2.bf16.msra.mxu0 0
  %77 = vmatprep.subr.bf16.mxu0 0
  %78 = vmatpush2.bf16.msra.mxu0 0
  %79 = vmatprep.mubr.bf16.mxu0 0
  %80 = vmatmul.mubr.bf16.gmra.mxu0 %v45
  %v81 = vpop.f32.mrf.mxu0
  %v82 = vadd.f32 %v35, %v81
  %v83 = vpop.f32.mrf.mxu0
  %v84 = vpop.f32.mrf.mxu0
  %v85 = vpop.f32.mrf.mxu0
  %86 = vdwg.mxu0
  %v87 = vmax.f32 %v82, 0.0
  %v88 = vpack.c.bf16 %v87, %v87
  %v89 = vld [vmem:[%s3] sm:$0xf]
  %v90 = vld [vmem:[%s3 + $0x4] sm:$0xf]
  %v91 = vld [vmem:[%s3 + $0x8] sm:$0xf]
  %v92 = vld [vmem:[%s3 + $0xc] sm:$0xf]
  %v93 = vld [vmem:[%s4] sm:$0x1]
  %v95 = vlaneseq
  %v96 = vshrl.u32 %v95, 7
  %v97 = vsub.s32 0, %v96
  %v98 = vrot.slane %v93, %v97
  %v104 = vunpack.c.l.b16 %v89
  %v105 = vunpack.c.l.b16 %v90
  %v106 = vunpack.c.l.b16 %v91
  %v107 = vunpack.c.l.b16 %v92
  %v108 = vpack.c.b16 %v105, %v104
  %v109 = vpack.c.b16 %v107, %v106
  %vm112 = vcmask 261120
  %v114 = vsel %vm112, %v88, 0
  %116 = vmatprep.subr.bf16.mxu0 0
  %117 = vmatpush1.bf16.msra.mxu0 0
  %118 = vmatprep.subr.bf16.mxu0 0
  %119 = vmatpush1.bf16.msra.mxu0 0
  %120 = vmatprep.subr.bf16.mxu0 0
  %121 = vmatpush1.bf16.msra.mxu0 0
  %122 = vmatprep.subr.bf16.mxu0 0
  %123 = vmatpush1.bf16.msra.mxu0 0
  %124 = vmatprep.subr.bf16.mxu0 0
  %125 = vmatpush1.bf16.msra.mxu0 0
  %126 = vmatprep.subr.bf16.mxu0 0
  %127 = vmatpush1.bf16.msra.mxu0 0
  %128 = vmatprep.subr.bf16.mxu0 0
  %129 = vmatpush1.bf16.msra.mxu0 %v109
  %130 = vmatprep.subr.bf16.mxu0 0
  %131 = vmatpush1.bf16.msra.mxu0 %v108
  %132 = vmatprep.subr.bf16.mxu0 0
  %133 = vmatpush2.bf16.msra.mxu0 0
  %134 = vmatprep.subr.bf16.mxu0 0
  %135 = vmatpush2.bf16.msra.mxu0 0
  %136 = vmatprep.subr.bf16.mxu0 0
  %137 = vmatpush2.bf16.msra.mxu0 0
  %138 = vmatprep.subr.bf16.mxu0 0
  %139 = vmatpush2.bf16.msra.mxu0 0
  %140 = vmatprep.subr.bf16.mxu0 0
  %141 = vmatpush2.bf16.msra.mxu0 0
  %142 = vmatprep.subr.bf16.mxu0 0
  %143 = vmatpush2.bf16.msra.mxu0 0
  %144 = vmatprep.subr.bf16.mxu0 0
  %145 = vmatpush2.bf16.msra.mxu0 0
  %146 = vmatprep.subr.bf16.mxu0 0
  %147 = vmatpush2.bf16.msra.mxu0 0
  %148 = vmatprep.mubr.bf16.mxu0 0
  %149 = vmatmul.mubr.bf16.gmra.mxu0 %v114
  %v150 = vpop.f32.mrf.mxu0
  %v151 = vadd.f32 %v98, %v150
  %v152 = vpop.f32.mrf.mxu0
  %v153 = vpop.f32.mrf.mxu0
  %v154 = vpop.f32.mrf.mxu0
  %155 = vdwg.mxu0
  %v156 = vmax.f32 %v151, 0.0
  %v157 = vpack.c.bf16 %v156, %v156
  %v158 = vld [vmem:[%s5] sm:$0xf]
  %v159 = vld [vmem:[%s5 + $0x4] sm:$0xf]
  %v160 = vld [vmem:[%s5 + $0x8] sm:$0xf]
  %v161 = vld [vmem:[%s5 + $0xc] sm:$0xf]
  %v162 = vld [vmem:[%s6] sm:$0x1]
  %v164 = vlaneseq
  %v165 = vshrl.u32 %v164, 7
  %v166 = vsub.s32 0, %v165
  %v167 = vrot.slane %v162, %v166
  %v173 = vunpack.c.l.b16 %v158
  %v174 = vunpack.c.l.b16 %v159
  %v175 = vunpack.c.l.b16 %v160
  %v176 = vunpack.c.l.b16 %v161
  %v177 = vpack.c.b16 %v174, %v173
  %v178 = vpack.c.b16 %v176, %v175
  %v182 = vsel %vm112, %v157, 0
  %184 = vmatprep.subr.bf16.mxu0 0
  %185 = vmatpush1.bf16.msra.mxu0 0
  %186 = vmatprep.subr.bf16.mxu0 0
  %187 = vmatpush1.bf16.msra.mxu0 0
  %188 = vmatprep.subr.bf16.mxu0 0
  %189 = vmatpush1.bf16.msra.mxu0 0
  %190 = vmatprep.subr.bf16.mxu0 0
  %191 = vmatpush1.bf16.msra.mxu0 0
  %192 = vmatprep.subr.bf16.mxu0 0
  %193 = vmatpush1.bf16.msra.mxu0 0
  %194 = vmatprep.subr.bf16.mxu0 0
  %195 = vmatpush1.bf16.msra.mxu0 0
  %196 = vmatprep.subr.bf16.mxu0 0
  %197 = vmatpush1.bf16.msra.mxu0 %v178
  %198 = vmatprep.subr.bf16.mxu0 0
  %199 = vmatpush1.bf16.msra.mxu0 %v177
  %200 = vmatprep.subr.bf16.mxu0 0
  %201 = vmatpush2.bf16.msra.mxu0 0
  %202 = vmatprep.subr.bf16.mxu0 0
  %203 = vmatpush2.bf16.msra.mxu0 0
  %204 = vmatprep.subr.bf16.mxu0 0
  %205 = vmatpush2.bf16.msra.mxu0 0
  %206 = vmatprep.subr.bf16.mxu0 0
  %207 = vmatpush2.bf16.msra.mxu0 0
  %208 = vmatprep.subr.bf16.mxu0 0
  %209 = vmatpush2.bf16.msra.mxu0 0
  %210 = vmatprep.subr.bf16.mxu0 0
  %211 = vmatpush2.bf16.msra.mxu0 0
  %212 = vmatprep.subr.bf16.mxu0 0
  %213 = vmatpush2.bf16.msra.mxu0 0
  %214 = vmatprep.subr.bf16.mxu0 0
  %215 = vmatpush2.bf16.msra.mxu0 0
  %216 = vmatprep.mubr.bf16.mxu0 0
  %217 = vmatmul.mubr.bf16.gmra.mxu0 %v182
  %v218 = vpop.f32.mrf.mxu0
  %v219 = vadd.f32 %v167, %v218
  %v220 = vpop.f32.mrf.mxu0
  %v221 = vpop.f32.mrf.mxu0
  %v222 = vpop.f32.mrf.mxu0
  %223 = vdwg.mxu0
  %224 = vmax.xlane.f32.xlu0 %v219
  %v225 = vpop.xlane.xlu0 %224
  %v226 = vsub.f32 %v219, %v225
  %v227 = vmul.f32 %v226, 1.442695
  %v228 = vpow.pop %v227
  %229 = vadd.xlane.f32.xlu0 %v228
  %v230 = vpop.xlane.xlu0 %229
  %v231 = vrcp.pop %v230
  %v232 = vmul.f32 %v228, %v231
  %233 = vst [vmem:[%s7] sm:$0xff] %v232
  // Predicated region
  $region30: #{policy_network_forward.1} parent=0 // pred_check
    _
  $region31: #{policy_network_forward.1} parent=0 // pred_check_branch
    %235 = sbr.rel (0) target = $region33
  $region32: #{policy_network_forward.1} parent=0 // pred_region
    _
  $region33: #{policy_network_forward.1} parent=0 // pred_fallthru
    _
  // Predicated region
  $region34: #{policy_network_forward.1} parent=0 // pred_check
    _
  $region35: #{policy_network_forward.1} parent=0 // pred_check_branch
    %237 = sbr.rel (0) target = $region37
  $region36: #{policy_network_forward.1} parent=0 // pred_region
    _
  $region37: #{policy_network_forward.1} parent=0 // pred_fallthru
    _

</llo_original>
